<compile_context>
chip_gen: v7x
topology: tpu7x:2x2x1
jax: 0.10.0
libtpu: 0.0.40
codegen_flags: <defaults>
</compile_context>

<pallas_src>
import jax
import jax.numpy as jnp
from jax import lax
from jax import image as jax_image
from jax.experimental import pallas as pl
from jax.experimental.pallas import tpu as pltpu

NEG_SLOPE = 0.01


# ----------------------------- Pallas kernel -------------------------------

def _conv_gemm_kernel(w_ref, x_ref, b_ref, o_ref):
    # w_ref: (Cout, K)   x_ref: (K, tile_m)   b_ref: (Cout, 1)   o_ref: (Cout, tile_m)
    acc = jnp.dot(w_ref[...], x_ref[...], preferred_element_type=jnp.float32)
    acc = acc + b_ref[...]                       # per-sublane bias, broadcast over lanes
    acc = jnp.where(acc >= 0, acc, NEG_SLOPE * acc)   # LeakyReLU(0.01)
    o_ref[...] = acc.astype(o_ref.dtype)


# ------------------------------- JAX glue ----------------------------------

def _upsample2_trilinear(x):
    """Trilinear x2 upsample, align_corners=False (separable, edge-clamped).

    Matches PyTorch nn.Upsample(scale_factor=2, mode='trilinear', align_corners=False):
      out[2i]   = 0.25*x[max(i-1,0)] + 0.75*x[i]
      out[2i+1] = 0.75*x[i]          + 0.25*x[min(i+1,n-1)]
    applied separably along D, H, W.
    """
    def up_axis(a, axis):
        n = a.shape[axis]
        prev = jnp.concatenate(
            [lax.slice_in_dim(a, 0, 1, axis=axis),
             lax.slice_in_dim(a, 0, n - 1, axis=axis)], axis=axis)
        nxt = jnp.concatenate(
            [lax.slice_in_dim(a, 1, n, axis=axis),
             lax.slice_in_dim(a, n - 1, n, axis=axis)], axis=axis)
        even = 0.25 * prev + 0.75 * a
        odd = 0.75 * a + 0.25 * nxt
        inter = jnp.stack([even, odd], axis=axis + 1)
        new_shape = list(a.shape)
        new_shape[axis] = 2 * n
        return inter.reshape(new_shape)

    for ax in (2, 3, 4):
        x = up_axis(x, ax)
    return x


def _im2col_k3p1_transposed(xu):
    """(N, C, D, H, W) -> X_T (K, M); K ordered (ci, kd, kh, kw), M ordered (n, d, h, w)."""
    N, C, D, H, W = xu.shape
    xp = jnp.pad(xu, ((0, 0), (0, 0), (1, 1), (1, 1), (1, 1)))
    taps = []
    for kd in range(3):
        for kh in range(3):
            for kw in range(3):
                taps.append(xp[:, :, kd:kd + D, kh:kh + H, kw:kw + W])
    xt = jnp.stack(taps, axis=0)                  # (27, N, C, D, H, W)
    xt = jnp.transpose(xt, (2, 0, 1, 3, 4, 5))    # (C, 27, N, D, H, W)
    return xt.reshape(C * 27, N * D * H * W)


def upsampling_block(x, weight, bias, *, stride=2, tile_m=2048,
                     compute_dtype=jnp.float32):
    """Forward of PCAMNet `Upsampling` (normalization='none').

    x:      (N, Cin, D, H, W)
    weight: (Cout, Cin, 3, 3, 3)
    bias:   (Cout,)
    Returns (N, Cout, D*stride, H*stride, W*stride), float32.
    """
    assert stride == 2, "this implementation specializes scale_factor=2"
    N, Cin, D, H, W = x.shape
    Cout = weight.shape[0]
    Du, Hu, Wu = D * stride, H * stride, W * stride

    # Trilinear x2 upsample then im2col, already transposed so M is the lane dim.
    xu = _upsample2_trilinear(x.astype(jnp.float32))
    x_t = _im2col_k3p1_transposed(xu)             # (K, M)
    K, M = x_t.shape
    w_mat = weight.reshape(Cout, K)               # K ordering matches X_T: (ci, kd, kh, kw)
    b_mat = bias.reshape(Cout, 1).astype(jnp.float32)

    # Lane-dense M tiling (multiple of 128), zero-padded final tile, cdiv grid.
    tile_m = max(128, min(int(tile_m), pl.cdiv(M, 128) * 128))
    Mp = pl.cdiv(M, tile_m) * tile_m
    if Mp != M:
        x_t = jnp.pad(x_t, ((0, 0), (0, Mp - M)))

    x_t = x_t.astype(compute_dtype)
    w_mat = w_mat.astype(compute_dtype)

    dsize = jnp.dtype(compute_dtype).itemsize
    cost = pl.CostEstimate(
        flops=2 * Mp * K * Cout,
        transcendentals=0,
        bytes_accessed=Mp * K * dsize + K * Cout * dsize + Mp * Cout * 4 + Cout * 4,
    )

    out_t = pl.pallas_call(
        _conv_gemm_kernel,
        out_shape=jax.ShapeDtypeStruct((Cout, Mp), jnp.float32),
        grid_spec=pltpu.PrefetchScalarGridSpec(
            num_scalar_prefetch=0,
            grid=(Mp // tile_m,),
            in_specs=[
                pl.BlockSpec((Cout, K), lambda i: (0, 0)),     # weights (resident)
                pl.BlockSpec((K, tile_m), lambda i: (0, i)),   # activations (streamed)
                pl.BlockSpec((Cout, 1), lambda i: (0, 0)),     # bias (one padded vreg)
            ],
            out_specs=pl.BlockSpec((Cout, tile_m), lambda i: (0, i)),
        ),
        compiler_params=pltpu.CompilerParams(
            dimension_semantics=("parallel",)),   # shards the M tiles across v7x's 2 TCs
        cost_estimate=cost,
    )(w_mat, x_t, b_mat)

    out = out_t[:, :M].reshape(Cout, N, Du, Hu, Wu)
    return jnp.transpose(out, (1, 0, 2, 3, 4))    # back to NCDHW


# ------------------------------- reference ---------------------------------

def _reference(x, weight, bias, stride=2):
    N, C, D, H, W = x.shape
    xu = jax_image.resize(
        x, (N, C, D * stride, H * stride, W * stride), method="trilinear")
    out = lax.conv_general_dilated(
        xu, weight,
        window_strides=(1, 1, 1),
        padding=((1, 1), (1, 1), (1, 1)),
        dimension_numbers=("NCDHW", "OIDHW", "NCDHW"))
    out = out + bias.reshape(1, -1, 1, 1, 1)
    return jnp.where(out >= 0, out, NEG_SLOPE * out)


if __name__ == "__main__":
    key = jax.random.PRNGKey(0)
    k1, k2, k3 = jax.random.split(key, 3)

    n_filters_in, n_filters_out, stride = 4, 8, 2
    N, D, H, W = 2, 8, 8, 8

    x = jax.random.normal(k1, (N, n_filters_in, D, H, W), dtype=jnp.float32)
    # Same shapes / init scale as nn.Conv3d(4, 8, kernel_size=3, padding=1).
    fan_in = n_filters_in * 3 ** 3
    bound = 1.0 / (fan_in ** 0.5)
    weight = jax.random.uniform(
        k2, (n_filters_out, n_filters_in, 3, 3, 3),
        dtype=jnp.float32, minval=-bound, maxval=bound)
    bias = jax.random.uniform(
        k3, (n_filters_out,), dtype=jnp.float32, minval=-bound, maxval=bound)

    ref = _reference(x, weight, bias, stride=stride)

    # f32 path (strict check against the lax reference).
    out = upsampling_block(x, weight, bias, stride=stride,
                           compute_dtype=jnp.float32)
    out = jax.block_until_ready(out)
    assert out.shape == (N, n_filters_out, D * stride, H * stride, W * stride)
    assert jnp.allclose(out, ref, atol=1e-4, rtol=1e-4), \
        float(jnp.max(jnp.abs(out - ref)))

    # bf16 activations/weights on the MXU (f32 accumulate) — looser tolerance.
    out_bf16 = upsampling_block(x, weight, bias, stride=stride,
                                compute_dtype=jnp.bfloat16)
    out_bf16 = jax.block_until_ready(out_bf16)
    assert jnp.allclose(out_bf16, ref, atol=5e-2, rtol=5e-2)

    print("KERNEL_OK")
</pallas_src>

<mosaic_0001>
module attributes {stable_mosaic.version = 11 : i64} {
  func.func @_conv_gemm_kernel(%arg0: i32, %arg1: memref<8x108xf32, #tpu.memory_space<vmem>>, %arg2: memref<108x2048xf32, #tpu.memory_space<vmem>>, %arg3: memref<8x1xf32, #tpu.memory_space<vmem>>, %arg4: memref<8x2048xf32, #tpu.memory_space<vmem>>) attributes {dimension_semantics = [#tpu.dimension_semantics<parallel>], iteration_bounds = array<i64: 4>, scalar_prefetch = 0 : i64, scratch_operands = 0 : i64, tpu.core_type = #tpu.core_type<tc>, window_params = [{pipeline_mode = #tpu.pipeline_mode<synchronous>, transform_indices = @transform_0, window_bounds = array<i64: 8, 108>}, {transform_indices = @transform_1, window_bounds = array<i64: 108, 2048>}, {pipeline_mode = #tpu.pipeline_mode<synchronous>, transform_indices = @transform_2, window_bounds = array<i64: 8, 1>}, {transform_indices = @transform_3, window_bounds = array<i64: 8, 2048>}]} {
    %c0 = arith.constant 0 : index
    %c0_0 = arith.constant 0 : index
    %0 = vector.load %arg1[%c0, %c0_0] : memref<8x108xf32, #tpu.memory_space<vmem>>, vector<8x108xf32>
    %c0_1 = arith.constant 0 : index
    %c0_2 = arith.constant 0 : index
    %1 = vector.load %arg2[%c0_1, %c0_2] : memref<108x2048xf32, #tpu.memory_space<vmem>>, vector<108x2048xf32>
    %cst = arith.constant dense<0.000000e+00> : vector<8x2048xf32>
    %2 = tpu.matmul %0, %1, %cst {dimension_numbers = #tpu.dot_dimension_numbers<[1], [0], [0], [1], [0, 0, 1, 1], [], []>} : vector<8x108xf32>, vector<108x2048xf32>, vector<8x2048xf32> -> vector<8x2048xf32>
    %c0_3 = arith.constant 0 : index
    %c0_4 = arith.constant 0 : index
    %3 = vector.load %arg3[%c0_3, %c0_4] : memref<8x1xf32, #tpu.memory_space<vmem>>, vector<8x1xf32>
    %4 = vector.broadcast %3 : vector<8x1xf32> to vector<8x2048xf32>
    %5 = arith.addf %2, %4 : vector<8x2048xf32>
    %cst_5 = arith.constant 0.000000e+00 : f32
    %6 = vector.broadcast %cst_5 : f32 to vector<8x2048xf32>
    %7 = arith.cmpf oge, %5, %6 : vector<8x2048xf32>
    %cst_6 = arith.constant 0.00999999977 : f32
    %8 = vector.broadcast %cst_6 : f32 to vector<8x2048xf32>
    %9 = arith.mulf %8, %5 : vector<8x2048xf32>
    %10 = arith.select %7, %5, %9 : vector<8x2048xi1>, vector<8x2048xf32>
    %c0_7 = arith.constant 0 : index
    %c0_8 = arith.constant 0 : index
    %11 = vector.load %arg4[%c0_7, %c0_8] : memref<8x2048xf32, #tpu.memory_space<vmem>>, vector<8x2048xf32>
    tpu.vector_store %arg4[%c0_7, %c0_8], %10 {strides = array<i32>} : memref<8x2048xf32, #tpu.memory_space<vmem>>, vector<8x2048xf32>,
    return
  }
  func.func @transform_0(%arg0: i32) -> (i32, i32) {
    %c0_i32 = arith.constant 0 : i32
    %c0_i32_0 = arith.constant 0 : i32
    %c0_i32_1 = arith.constant 0 : i32
    return %c0_i32, %c0_i32_0 : i32, i32
  }
  func.func @transform_1(%arg0: i32) -> (i32, i32) {
    %c0_i32 = arith.constant 0 : i32
    %c0_i32_0 = arith.constant 0 : i32
    return %c0_i32, %arg0 : i32, i32
  }
  func.func @transform_2(%arg0: i32) -> (i32, i32) {
    %c0_i32 = arith.constant 0 : i32
    %c0_i32_0 = arith.constant 0 : i32
    %c0_i32_1 = arith.constant 0 : i32
    return %c0_i32, %c0_i32_0 : i32, i32
  }
  func.func @transform_3(%arg0: i32) -> (i32, i32) {
    %c0_i32 = arith.constant 0 : i32
    %c0_i32_0 = arith.constant 0 : i32
    return %c0_i32, %arg0 : i32, i32
  }
}

</mosaic_0001>

<llo_original>
// kernel: tpu_custom_call.1
$region0: #{tpu_custom_call.1}
  #allocation0 [shape = 'u32[]', space=smem, size = 0x4, offset = 0x4, fixed_abs, tag = 'smem constant byte address 0x4 - core index']
  #allocation1 [shape = 'u32[144,128]{1,0:T(1,128)}', space=vmem, size = 0x12000, scoped, tag = 'internal scratch']
  %s0 = inlined_call_operand.hbm [shape: f32[8,108], index: 0, kind: input, shape index: {}]
  %s1 = inlined_call_operand.hbm [shape: f32[108,8192], index: 1, kind: input, shape index: {}]
  %s2 = inlined_call_operand.vmem [shape: f32[8,1], index: 2, kind: input, shape index: {}]
  %s3 = inlined_call_operand.hbm [shape: f32[8,8192], index: 3, kind: output, shape index: {}]
  %s4 = sld [smem:[#allocation0]]
  $region53: #{tpu_custom_call.1} parent=0
    _
  %s6 = ssub.s32 1, %s4
  %s7 = scalar_select 0, %s6, %s4
  $region1: #{tpu_custom_call.1} parent=0
    #allocation2 [shape = 'u8[4096]{0}', space=vmem, size = 0x1000, scoped, tag = 'input window, operand 0, single buffered']
    #allocation3 [shape = 's32[2]{0}', space=sflag, size = 0x8, scoped, tag = 'scoped memory for tpu_custom_call.1']
    #allocation4 [shape = 's32[2]{0}', space=sflag, size = 0x8, scoped, tag = 'scoped memory for tpu_custom_call.1']
    #allocation5 [shape = 'u8[1835008]{0}', space=vmem, size = 0x1c0000, scoped, tag = 'input window, operand 1']
    #allocation6 [shape = 's32[2]{0}', space=sflag, size = 0x8, scoped, tag = 'scoped memory for tpu_custom_call.1']
    #allocation7 [shape = 'u8[131072]{0}', space=vmem, size = 0x20000, scoped, tag = 'output window, operand 0']
    %8 = vsyncpa [#allocation3], 0
    %9 = vsyncpa [#allocation6], 0
    %s10 = scalar_lea.sflag [#allocation6], 1
    %11 = vsyncpa %s10, 0
    %12 = vsyncpa [#allocation4], 0
    %s13 = scalar_lea.sflag [#allocation4], 1
    %14 = vsyncpa %s13, 0
    loop: start=0, step=1, limit=6
    $region2: #{tpu_custom_call.1} parent=1 // loop_pre_header
      _
    $region3: #{tpu_custom_call.1} parent=1 // loop_header
      %s16 = sphi 0, %s20
      %p17 = scmp.ge.s32.totalorder %s16, 6
      %s24 = sphi 0, %s24
      %s26 = sphi 0, %s24
      %s27 = sphi 0, %s26
      %s41 = sphi 0, %s27
      %s47 = sphi 0, %s49
      %s50 = sphi 0, %s47
      %s51 = sphi 0, %s50
      %s67 = sphi 0, %s51
      %s71 = sphi 0, %s71
      %s73 = sphi 0, %s71
      %s74 = sphi 0, %s73
      %s88 = sphi 0, %s74
      %s94 = sphi 0, %s96
      %s97 = sphi 0, %s94
      %s98 = sphi 0, %s97
      %s114 = sphi 0, %s98
    $region4: #{tpu_custom_call.1} parent=1 // loop_header_branch
      %19 = sbr.rel (%p17) target = $region8
    $region5: #{tpu_custom_call.1} parent=1 // loop_body
      %s21 = ssub.s32 %s16, 1
      %s22 = ssub.s32 %s16, 2
      %s23 = sadd.s32 %s16, 1
      %s25 = sadd.s32 %s24, 1
      %p28 = scmp.eq.s32.totalorder %s16, 3
      %p29 = scmp.ne.s32.totalorder %s24, %s26
      %p30 = scmp.eq.s32.totalorder %s16, 0
      %p31 = por %p29, %p30
      %p32 = scmp.ne.s32.totalorder %s24, %s26
      %p33 = scmp.eq.s32.totalorder %s21, 3
      %p34 = por %p32, %p33
      %p35 = scmp.ne.s32.totalorder %s26, %s27
      %p36 = scmp.eq.s32.totalorder %s21, 0
      %p37 = por %p35, %p36
      %p38 = scmp.ne.s32.totalorder %s26, %s27
      %p39 = scmp.eq.s32.totalorder %s22, 3
      %p40 = por %p38, %p39
      %p42 = scmp.ne.s32.totalorder %s27, %s41
      %p43 = scmp.eq.s32.totalorder %s22, 0
      %p44 = por %p42, %p43
      %s45 = ssub.s32 %s16, %s23
      %p46 = scmp.eq.s32.totalorder %s45, 0
      %s48 = sadd.s32 %s47, 1
      %s49 = scalar_select %p46, %s47, %s48
      %p52 = pneg %p46
      %p53 = scmp.eq.s32.totalorder %s16, 3
      %p54 = por %p52, %p53
      %p55 = scmp.ne.s32.totalorder %s47, %s50
      %p56 = scmp.eq.s32.totalorder %s16, 0
      %p57 = por %p55, %p56
      %p58 = scmp.ne.s32.totalorder %s47, %s50
      %p59 = scmp.eq.s32.totalorder %s21, 3
      %p60 = por %p58, %p59
      %p61 = scmp.ne.s32.totalorder %s50, %s51
      %p62 = scmp.eq.s32.totalorder %s21, 0
      %p63 = por %p61, %p62
      %p64 = scmp.ne.s32.totalorder %s50, %s51
      %p65 = scmp.eq.s32.totalorder %s22, 3
      %p66 = por %p64, %p65
      %p68 = scmp.ne.s32.totalorder %s51, %s67
      %p69 = scmp.eq.s32.totalorder %s22, 0
      %p70 = por %p68, %p69
      %s72 = sadd.s32 %s71, 1
      %p75 = scmp.eq.s32.totalorder %s16, 3
      %p76 = scmp.ne.s32.totalorder %s71, %s73
      %p77 = scmp.eq.s32.totalorder %s16, 0
      %p78 = por %p76, %p77
      %p79 = scmp.ne.s32.totalorder %s71, %s73
      %p80 = scmp.eq.s32.totalorder %s21, 3
      %p81 = por %p79, %p80
      %p82 = scmp.ne.s32.totalorder %s73, %s74
      %p83 = scmp.eq.s32.totalorder %s21, 0
      %p84 = por %p82, %p83
      %p85 = scmp.ne.s32.totalorder %s73, %s74
      %p86 = scmp.eq.s32.totalorder %s22, 3
      %p87 = por %p85, %p86
      %p89 = scmp.ne.s32.totalorder %s74, %s88
      %p90 = scmp.eq.s32.totalorder %s22, 0
      %p91 = por %p89, %p90
      %s92 = ssub.s32 %s16, %s23
      %p93 = scmp.eq.s32.totalorder %s92, 0
      %s95 = sadd.s32 %s94, 1
      %s96 = scalar_select %p93, %s94, %s95
      %p99 = pneg %p93
      %p100 = scmp.eq.s32.totalorder %s16, 3
      %p101 = por %p99, %p100
      %p102 = scmp.ne.s32.totalorder %s94, %s97
      %p103 = scmp.eq.s32.totalorder %s16, 0
      %p104 = por %p102, %p103
      %p105 = scmp.ne.s32.totalorder %s94, %s97
      %p106 = scmp.eq.s32.totalorder %s21, 3
      %p107 = por %p105, %p106
      %p108 = scmp.ne.s32.totalorder %s97, %s98
      %p109 = scmp.eq.s32.totalorder %s21, 0
      %p110 = por %p108, %p109
      %p111 = scmp.ne.s32.totalorder %s97, %s98
      %p112 = scmp.eq.s32.totalorder %s22, 3
      %p113 = por %p111, %p112
      %p115 = scmp.ne.s32.totalorder %s98, %s114
      %p116 = scmp.eq.s32.totalorder %s22, 0
      %p117 = por %p115, %p116
      %p118 = scmp.le.s32.totalorder 1, %s16
      %p119 = scmp.lt.s32.totalorder %s16, 5
      %p120 = pnand %p118, %p119
      %p121 = pneg %p120
      // Predicated region
      $region9: #{tpu_custom_call.1} parent=5 // pred_check
        _
      $region10: #{tpu_custom_call.1} parent=5 // pred_check_branch
        %123 = sbr.rel (%p120) target = $region12
      $region11: #{tpu_custom_call.1} parent=5 // pred_region
        %s124 = ssub.s32 %s16, 1
        // Predicated region
        $region13: #{tpu_custom_call.1} parent=11 // pred_check
          %p125 = pneg %p37
        $region14: #{tpu_custom_call.1} parent=11 // pred_check_branch
          %127 = sbr.rel (%p125) target = $region16
        $region15: #{tpu_custom_call.1} parent=11 // pred_region
          %s129 = ssub.s32 128, 128
          %130 = vsyncadd [#allocation3], %s129
          %s132 = sshll.u32 [#allocation2], 4
          %s133 = int_to_ptr.vmem [resolvable:$true] %s132
          %135 = dma.hbm_to_vmem [thread:$0]  %s0, 128, %s133, [#allocation3]
        $region16: #{tpu_custom_call.1} parent=11 // pred_fallthru
          _
        // Predicated region
        $region17: #{tpu_custom_call.1} parent=11 // pred_check
          %p136 = pneg %p84
        $region18: #{tpu_custom_call.1} parent=11 // pred_check_branch
          %138 = sbr.rel (%p136) target = $region20
        $region19: #{tpu_custom_call.1} parent=11 // pred_region
          _
        $region20: #{tpu_custom_call.1} parent=11 // pred_fallthru
          _
      $region12: #{tpu_custom_call.1} parent=5 // pred_fallthru
        _
      %p139 = scmp.lt.s32.totalorder %s16, 4
      // Predicated region
      $region21: #{tpu_custom_call.1} parent=5 // pred_check
        %p140 = pneg %p139
      $region22: #{tpu_custom_call.1} parent=5 // pred_check_branch
        %142 = sbr.rel (%p140) target = $region24
      $region23: #{tpu_custom_call.1} parent=5 // pred_region
        // Predicated region
        $region25: #{tpu_custom_call.1} parent=23 // pred_check
          %p143 = pneg %p57
        $region26: #{tpu_custom_call.1} parent=23 // pred_check_branch
          %145 = sbr.rel (%p143) target = $region28
        $region27: #{tpu_custom_call.1} parent=23 // pred_region
          %s146 = sand.u32 %s47, 1
          %s147 = scalar_lea.sflag [#allocation6], %s146
          %s148 = sand.u32 %s47, 1
          %s149 = smul.addr %s148, 1792
          %s150 = scalar_lea.vmem [#allocation5], %s149
          %s151 = smul.u32 16, %s16
          %s153 = ssub.s32 28672, 28672
          %154 = vsyncadd %s147, %s153
          %s155 = smul.addr %s151, 128
          %s156 = scalar_lea.hbm %s1, %s155
          %s157 = sshll.u32 %s150, 4
          %s158 = int_to_ptr.vmem [resolvable:$true] %s157
          %163 = dma.hbm_to_vmem [thread:$0]  %s156, 28672, %s158, %s147, 8192, 2048, 128
        $region28: #{tpu_custom_call.1} parent=23 // pred_fallthru
          _
      $region24: #{tpu_custom_call.1} parent=5 // pred_fallthru
        _
      %p164 = scmp.le.s32.totalorder 1, %s16
      %p165 = scmp.lt.s32.totalorder %s16, 5
      %p166 = pnand %p164, %p165
      %p167 = pneg %p166
      // Predicated region
      $region29: #{tpu_custom_call.1} parent=5 // pred_check
        _
      $region30: #{tpu_custom_call.1} parent=5 // pred_check_branch
        %169 = sbr.rel (%p166) target = $region32
      $region31: #{tpu_custom_call.1} parent=5 // pred_region
        %s170 = ssub.s32 %s16, 1
        // Predicated region
        $region33: #{tpu_custom_call.1} parent=31 // pred_check
          %p171 = pneg %p37
        $region34: #{tpu_custom_call.1} parent=31 // pred_check_branch
          %173 = sbr.rel (%p171) target = $region36
        $region35: #{tpu_custom_call.1} parent=31 // pred_region
          %174 = dma.done [#allocation3], 128
        $region36: #{tpu_custom_call.1} parent=31 // pred_fallthru
          _
        %s175 = sand.u32 %s50, 1
        %s176 = scalar_lea.sflag [#allocation6], %s175
        %s177 = sand.u32 %s50, 1
        %s178 = smul.addr %s177, 1792
        %s179 = scalar_lea.vmem [#allocation5], %s178
        // Predicated region
        $region37: #{tpu_custom_call.1} parent=31 // pred_check
          %p180 = pneg %p63
        $region38: #{tpu_custom_call.1} parent=31 // pred_check_branch
          %182 = sbr.rel (%p180) target = $region40
        $region39: #{tpu_custom_call.1} parent=31 // pred_region
          %183 = dma.done %s176, 28672
        $region40: #{tpu_custom_call.1} parent=31 // pred_fallthru
          _
        %p184 = pneg %p37
        %p185 = pneg %p34
        %s186 = sand.u32 %s50, 1
        %s187 = scalar_lea.sflag [#allocation6], %s186
        %s188 = sand.u32 %s50, 1
        %s189 = smul.addr %s188, 1792
        %s190 = scalar_lea.vmem [#allocation5], %s189
        %p191 = pneg %p63
        %p192 = pneg %p60
        %p193 = pneg %p84
        %p194 = pneg %p81
        %p195 = pneg %p110
        %p196 = pneg %p107
        %s197 = sand.u32 %s97, 1
        %s198 = scalar_lea.sflag [#allocation4], %s197
        %s199 = sand.u32 %s97, 1
        %s200 = smul.addr %s199, 128
        %s201 = scalar_lea.vmem [#allocation7], %s200
        %s202 = smul.u32 16, %s21
        %s203 = smul.u32 16, %s21
        %v204 = vld [vmem:[#allocation2] sm:$0xff]
        %v205 = vld [vmem:[%s179] sm:$0xff]
        %v206 = vld [vmem:[%s179 + $0x8] sm:$0xff]
        %v207 = vld [vmem:[%s179 + $0x10] sm:$0xff]
        %v208 = vld [vmem:[%s179 + $0x18] sm:$0xff]
        %v209 = vld [vmem:[%s179 + $0x20] sm:$0xff]
        %v210 = vld [vmem:[%s179 + $0x28] sm:$0xff]
        %v211 = vld [vmem:[%s179 + $0x30] sm:$0xff]
        %v212 = vld [vmem:[%s179 + $0x38] sm:$0xff]
        %v213 = vld [vmem:[%s179 + $0x40] sm:$0xff]
        %v214 = vld [vmem:[%s179 + $0x48] sm:$0xff]
        %v215 = vld [vmem:[%s179 + $0x50] sm:$0xff]
        %v216 = vld [vmem:[%s179 + $0x58] sm:$0xff]
        %v217 = vld [vmem:[%s179 + $0x60] sm:$0xff]
        %v218 = vld [vmem:[%s179 + $0x68] sm:$0xff]
        %v219 = vld [vmem:[%s179 + $0x70] sm:$0xff]
        %v220 = vld [vmem:[%s179 + $0x78] sm:$0xff]
        %v221 = vld [vmem:[%s179 + $0x80] sm:$0xff]
        %v222 = vld [vmem:[%s179 + $0x88] sm:$0xff]
        %v223 = vld [vmem:[%s179 + $0x90] sm:$0xff]
        %v224 = vld [vmem:[%s179 + $0x98] sm:$0xff]
        %v225 = vld [vmem:[%s179 + $0xa0] sm:$0xff]
        %v226 = vld [vmem:[%s179 + $0xa8] sm:$0xff]
        %v227 = vld [vmem:[%s179 + $0xb0] sm:$0xff]
        %v228 = vld [vmem:[%s179 + $0xb8] sm:$0xff]
        %v229 = vld [vmem:[%s179 + $0xc0] sm:$0xff]
        %v230 = vld [vmem:[%s179 + $0xc8] sm:$0xff]
        %v231 = vld [vmem:[%s179 + $0xd0] sm:$0xff]
        %v232 = vld [vmem:[%s179 + $0xd8] sm:$0xff]
        %v233 = vld [vmem:[%s179 + $0xe0] sm:$0xff]
        %v234 = vld [vmem:[%s179 + $0xe8] sm:$0xff]
        %v235 = vld [vmem:[%s179 + $0xf0] sm:$0xff]
        %v236 = vld [vmem:[%s179 + $0xf8] sm:$0xff]
        %v237 = vld [vmem:[%s179 + $0x100] sm:$0xff]
        %v238 = vld [vmem:[%s179 + $0x108] sm:$0xff]
        %v239 = vld [vmem:[%s179 + $0x110] sm:$0xff]
        %v240 = vld [vmem:[%s179 + $0x118] sm:$0xff]
        %v241 = vld [vmem:[%s179 + $0x120] sm:$0xff]
        %v242 = vld [vmem:[%s179 + $0x128] sm:$0xff]
        %v243 = vld [vmem:[%s179 + $0x130] sm:$0xff]
        %v244 = vld [vmem:[%s179 + $0x138] sm:$0xff]
        %v245 = vld [vmem:[%s179 + $0x140] sm:$0xff]
        %v246 = vld [vmem:[%s179 + $0x148] sm:$0xff]
        %v247 = vld [vmem:[%s179 + $0x150] sm:$0xff]
        %v248 = vld [vmem:[%s179 + $0x158] sm:$0xff]
        %v249 = vld [vmem:[%s179 + $0x160] sm:$0xff]
        %v250 = vld [vmem:[%s179 + $0x168] sm:$0xff]
        %v251 = vld [vmem:[%s179 + $0x170] sm:$0xff]
        %v252 = vld [vmem:[%s179 + $0x178] sm:$0xff]
        %v253 = vld [vmem:[%s179 + $0x180] sm:$0xff]
        %v254 = vld [vmem:[%s179 + $0x188] sm:$0xff]
        %v255 = vld [vmem:[%s179 + $0x190] sm:$0xff]
        %v256 = vld [vmem:[%s179 + $0x198] sm:$0xff]
        %v257 = vld [vmem:[%s179 + $0x1a0] sm:$0xff]
        %v258 = vld [vmem:[%s179 + $0x1a8] sm:$0xff]
        %v259 = vld [vmem:[%s179 + $0x1b0] sm:$0xff]
        %v260 = vld [vmem:[%s179 + $0x1b8] sm:$0xff]
        %v261 = vld [vmem:[%s179 + $0x1c0] sm:$0xff]
        %v262 = vld [vmem:[%s179 + $0x1c8] sm:$0xff]
        %v263 = vld [vmem:[%s179 + $0x1d0] sm:$0xff]
        %v264 = vld [vmem:[%s179 + $0x1d8] sm:$0xff]
        %v265 = vld [vmem:[%s179 + $0x1e0] sm:$0xff]
        %v266 = vld [vmem:[%s179 + $0x1e8] sm:$0xff]
        %v267 = vld [vmem:[%s179 + $0x1f0] sm:$0xff]
        %v268 = vld [vmem:[%s179 + $0x1f8] sm:$0xff]
        %v269 = vld [vmem:[%s179 + $0x200] sm:$0xff]
        %v270 = vld [vmem:[%s179 + $0x208] sm:$0xff]
        %v271 = vld [vmem:[%s179 + $0x210] sm:$0xff]
        %v272 = vld [vmem:[%s179 + $0x218] sm:$0xff]
        %v273 = vld [vmem:[%s179 + $0x220] sm:$0xff]
        %v274 = vld [vmem:[%s179 + $0x228] sm:$0xff]
        %v275 = vld [vmem:[%s179 + $0x230] sm:$0xff]
        %v276 = vld [vmem:[%s179 + $0x238] sm:$0xff]
        %v277 = vld [vmem:[%s179 + $0x240] sm:$0xff]
        %v278 = vld [vmem:[%s179 + $0x248] sm:$0xff]
        %v279 = vld [vmem:[%s179 + $0x250] sm:$0xff]
        %v280 = vld [vmem:[%s179 + $0x258] sm:$0xff]
        %v281 = vld [vmem:[%s179 + $0x260] sm:$0xff]
        %v282 = vld [vmem:[%s179 + $0x268] sm:$0xff]
        %v283 = vld [vmem:[%s179 + $0x270] sm:$0xff]
        %v284 = vld [vmem:[%s179 + $0x278] sm:$0xff]
        %v285 = vld [vmem:[%s179 + $0x280] sm:$0xff]
        %v286 = vld [vmem:[%s179 + $0x288] sm:$0xff]
        %v287 = vld [vmem:[%s179 + $0x290] sm:$0xff]
        %v288 = vld [vmem:[%s179 + $0x298] sm:$0xff]
        %v289 = vld [vmem:[%s179 + $0x2a0] sm:$0xff]
        %v290 = vld [vmem:[%s179 + $0x2a8] sm:$0xff]
        %v291 = vld [vmem:[%s179 + $0x2b0] sm:$0xff]
        %v292 = vld [vmem:[%s179 + $0x2b8] sm:$0xff]
        %v293 = vld [vmem:[%s179 + $0x2c0] sm:$0xff]
        %v294 = vld [vmem:[%s179 + $0x2c8] sm:$0xff]
        %v295 = vld [vmem:[%s179 + $0x2d0] sm:$0xff]
        %v296 = vld [vmem:[%s179 + $0x2d8] sm:$0xff]
        %v297 = vld [vmem:[%s179 + $0x2e0] sm:$0xff]
        %v298 = vld [vmem:[%s179 + $0x2e8] sm:$0xff]
        %v299 = vld [vmem:[%s179 + $0x2f0] sm:$0xff]
        %v300 = vld [vmem:[%s179 + $0x2f8] sm:$0xff]
        %v301 = vld [vmem:[%s179 + $0x300] sm:$0xff]
        %v302 = vld [vmem:[%s179 + $0x308] sm:$0xff]
        %v303 = vld [vmem:[%s179 + $0x310] sm:$0xff]
        %v304 = vld [vmem:[%s179 + $0x318] sm:$0xff]
        %v305 = vld [vmem:[%s179 + $0x320] sm:$0xff]
        %v306 = vld [vmem:[%s179 + $0x328] sm:$0xff]
        %v307 = vld [vmem:[%s179 + $0x330] sm:$0xff]
        %v308 = vld [vmem:[%s179 + $0x338] sm:$0xff]
        %v309 = vld [vmem:[%s179 + $0x340] sm:$0xff]
        %v310 = vld [vmem:[%s179 + $0x348] sm:$0xff]
        %v311 = vld [vmem:[%s179 + $0x350] sm:$0xff]
        %v312 = vld [vmem:[%s179 + $0x358] sm:$0xff]
        %v313 = vld [vmem:[%s179 + $0x360] sm:$0xff]
        %v314 = vld [vmem:[%s179 + $0x368] sm:$0xff]
        %v315 = vld [vmem:[%s179 + $0x370] sm:$0xff]
        %v316 = vld [vmem:[%s179 + $0x378] sm:$0xff]
        %v317 = vld [vmem:[%s179 + $0x380] sm:$0xff]
        %v318 = vld [vmem:[%s179 + $0x388] sm:$0xff]
        %v319 = vld [vmem:[%s179 + $0x390] sm:$0xff]
        %v320 = vld [vmem:[%s179 + $0x398] sm:$0xff]
        %v321 = vld [vmem:[%s179 + $0x3a0] sm:$0xff]
        %v322 = vld [vmem:[%s179 + $0x3a8] sm:$0xff]
        %v323 = vld [vmem:[%s179 + $0x3b0] sm:$0xff]
        %v324 = vld [vmem:[%s179 + $0x3b8] sm:$0xff]
        %v325 = vld [vmem:[%s179 + $0x3c0] sm:$0xff]
        %v326 = vld [vmem:[%s179 + $0x3c8] sm:$0xff]
        %v327 = vld [vmem:[%s179 + $0x3d0] sm:$0xff]
        %v328 = vld [vmem:[%s179 + $0x3d8] sm:$0xff]
        %v329 = vld [vmem:[%s179 + $0x3e0] sm:$0xff]
        %v330 = vld [vmem:[%s179 + $0x3e8] sm:$0xff]
        %v331 = vld [vmem:[%s179 + $0x3f0] sm:$0xff]
        %v332 = vld [vmem:[%s179 + $0x3f8] sm:$0xff]
        %v333 = vld [vmem:[%s179 + $0x400] sm:$0xff]
        %v334 = vld [vmem:[%s179 + $0x408] sm:$0xff]
        %v335 = vld [vmem:[%s179 + $0x410] sm:$0xff]
        %v336 = vld [vmem:[%s179 + $0x418] sm:$0xff]
        %v337 = vld [vmem:[%s179 + $0x420] sm:$0xff]
        %v338 = vld [vmem:[%s179 + $0x428] sm:$0xff]
        %v339 = vld [vmem:[%s179 + $0x430] sm:$0xff]
        %v340 = vld [vmem:[%s179 + $0x438] sm:$0xff]
        %v341 = vld [vmem:[%s179 + $0x440] sm:$0xff]
        %v342 = vld [vmem:[%s179 + $0x448] sm:$0xff]
        %v343 = vld [vmem:[%s179 + $0x450] sm:$0xff]
        %v344 = vld [vmem:[%s179 + $0x458] sm:$0xff]
        %v345 = vld [vmem:[%s179 + $0x460] sm:$0xff]
        %v346 = vld [vmem:[%s179 + $0x468] sm:$0xff]
        %v347 = vld [vmem:[%s179 + $0x470] sm:$0xff]
        %v348 = vld [vmem:[%s179 + $0x478] sm:$0xff]
        %v349 = vld [vmem:[%s179 + $0x480] sm:$0xff]
        %v350 = vld [vmem:[%s179 + $0x488] sm:$0xff]
        %v351 = vld [vmem:[%s179 + $0x490] sm:$0xff]
        %v352 = vld [vmem:[%s179 + $0x498] sm:$0xff]
        %v353 = vld [vmem:[%s179 + $0x4a0] sm:$0xff]
        %v354 = vld [vmem:[%s179 + $0x4a8] sm:$0xff]
        %v355 = vld [vmem:[%s179 + $0x4b0] sm:$0xff]
        %v356 = vld [vmem:[%s179 + $0x4b8] sm:$0xff]
        %v357 = vld [vmem:[%s179 + $0x4c0] sm:$0xff]
        %v358 = vld [vmem:[%s179 + $0x4c8] sm:$0xff]
        %v359 = vld [vmem:[%s179 + $0x4d0] sm:$0xff]
        %v360 = vld [vmem:[%s179 + $0x4d8] sm:$0xff]
        %v361 = vld [vmem:[%s179 + $0x4e0] sm:$0xff]
        %v362 = vld [vmem:[%s179 + $0x4e8] sm:$0xff]
        %v363 = vld [vmem:[%s179 + $0x4f0] sm:$0xff]
        %v364 = vld [vmem:[%s179 + $0x4f8] sm:$0xff]
        %v365 = vld [vmem:[%s179 + $0x500] sm:$0xff]
        %v366 = vld [vmem:[%s179 + $0x508] sm:$0xff]
        %v367 = vld [vmem:[%s179 + $0x510] sm:$0xff]
        %v368 = vld [vmem:[%s179 + $0x518] sm:$0xff]
        %v369 = vld [vmem:[%s179 + $0x520] sm:$0xff]
        %v370 = vld [vmem:[%s179 + $0x528] sm:$0xff]
        %v371 = vld [vmem:[%s179 + $0x530] sm:$0xff]
        %v372 = vld [vmem:[%s179 + $0x538] sm:$0xff]
        %v373 = vld [vmem:[%s179 + $0x540] sm:$0xff]
        %v374 = vld [vmem:[%s179 + $0x548] sm:$0xff]
        %v375 = vld [vmem:[%s179 + $0x550] sm:$0xff]
        %v376 = vld [vmem:[%s179 + $0x558] sm:$0xff]
        %v377 = vld [vmem:[%s179 + $0x560] sm:$0xff]
        %v378 = vld [vmem:[%s179 + $0x568] sm:$0xff]
        %v379 = vld [vmem:[%s179 + $0x570] sm:$0xff]
        %v380 = vld [vmem:[%s179 + $0x578] sm:$0xff]
        %v381 = vld [vmem:[%s179 + $0x580] sm:$0xff]
        %v382 = vld [vmem:[%s179 + $0x588] sm:$0xff]
        %v383 = vld [vmem:[%s179 + $0x590] sm:$0xff]
        %v384 = vld [vmem:[%s179 + $0x598] sm:$0xff]
        %v385 = vld [vmem:[%s179 + $0x5a0] sm:$0xff]
        %v386 = vld [vmem:[%s179 + $0x5a8] sm:$0xff]
        %v387 = vld [vmem:[%s179 + $0x5b0] sm:$0xff]
        %v388 = vld [vmem:[%s179 + $0x5b8] sm:$0xff]
        %v389 = vld [vmem:[%s179 + $0x5c0] sm:$0xff]
        %v390 = vld [vmem:[%s179 + $0x5c8] sm:$0xff]
        %v391 = vld [vmem:[%s179 + $0x5d0] sm:$0xff]
        %v392 = vld [vmem:[%s179 + $0x5d8] sm:$0xff]
        %v393 = vld [vmem:[%s179 + $0x5e0] sm:$0xff]
        %v394 = vld [vmem:[%s179 + $0x5e8] sm:$0xff]
        %v395 = vld [vmem:[%s179 + $0x5f0] sm:$0xff]
        %v396 = vld [vmem:[%s179 + $0x5f8] sm:$0xff]
        %v397 = vld [vmem:[%s179 + $0x600] sm:$0xff]
        %v398 = vld [vmem:[%s179 + $0x608] sm:$0xff]
        %v399 = vld [vmem:[%s179 + $0x610] sm:$0xff]
        %v400 = vld [vmem:[%s179 + $0x618] sm:$0xff]
        %v401 = vld [vmem:[%s179 + $0x620] sm:$0xff]
        %v402 = vld [vmem:[%s179 + $0x628] sm:$0xff]
        %v403 = vld [vmem:[%s179 + $0x630] sm:$0xff]
        %v404 = vld [vmem:[%s179 + $0x638] sm:$0xff]
        %v405 = vld [vmem:[%s179 + $0x640] sm:$0xff]
        %v406 = vld [vmem:[%s179 + $0x648] sm:$0xff]
        %v407 = vld [vmem:[%s179 + $0x650] sm:$0xff]
        %v408 = vld [vmem:[%s179 + $0x658] sm:$0xff]
        %v409 = vld [vmem:[%s179 + $0x660] sm:$0xff]
        %v410 = vld [vmem:[%s179 + $0x668] sm:$0xff]
        %v411 = vld [vmem:[%s179 + $0x670] sm:$0xff]
        %v412 = vld [vmem:[%s179 + $0x678] sm:$0xff]
        %v413 = vld [vmem:[%s179 + $0x680] sm:$0xf]
        %v414 = vld [vmem:[%s179 + $0x688] sm:$0xf]
        %v415 = vld [vmem:[%s179 + $0x690] sm:$0xf]
        %v416 = vld [vmem:[%s179 + $0x698] sm:$0xf]
        %v417 = vld [vmem:[%s179 + $0x6a0] sm:$0xf]
        %v418 = vld [vmem:[%s179 + $0x6a8] sm:$0xf]
        %v419 = vld [vmem:[%s179 + $0x6b0] sm:$0xf]
        %v420 = vld [vmem:[%s179 + $0x6b8] sm:$0xf]
        %v421 = vld [vmem:[%s179 + $0x6c0] sm:$0xf]
        %v422 = vld [vmem:[%s179 + $0x6c8] sm:$0xf]
        %v423 = vld [vmem:[%s179 + $0x6d0] sm:$0xf]
        %v424 = vld [vmem:[%s179 + $0x6d8] sm:$0xf]
        %v425 = vld [vmem:[%s179 + $0x6e0] sm:$0xf]
        %v426 = vld [vmem:[%s179 + $0x6e8] sm:$0xf]
        %v427 = vld [vmem:[%s179 + $0x6f0] sm:$0xf]
        %v428 = vld [vmem:[%s179 + $0x6f8] sm:$0xf]
        %v429 = vld [vmem:[%s2] sm:$0xff]
        %431 = vset.pattern.permute.xlu0 0
        %432 = vperm.xlu0 %431, %v429
        %v433 = vpop.permute.xlu0 %432
        %vm435 = vcmask 883712
        %v437 = vsel %vm435, %v204, 0
        %vm439 = vcmask 1043456
        %v441 = vsel %vm439, %v413, 0
        %v444 = vsel %vm439, %v414, 0
        %v447 = vsel %vm439, %v415, 0
        %v450 = vsel %vm439, %v416, 0
        %v453 = vsel %vm439, %v417, 0
        %v456 = vsel %vm439, %v418, 0
        %v459 = vsel %vm439, %v419, 0
        %v462 = vsel %vm439, %v420, 0
        %v465 = vsel %vm439, %v421, 0
        %v468 = vsel %vm439, %v422, 0
        %v471 = vsel %vm439, %v423, 0
        %v474 = vsel %vm439, %v424, 0
        %v477 = vsel %vm439, %v425, 0
        %v480 = vsel %vm439, %v426, 0
        %v483 = vsel %vm439, %v427, 0
        %v486 = vsel %vm439, %v428, 0
        %488 = vmatprep.subr.mxu0 %v206
        %489 = vmatpush1.msra.mxu0 %v205
        %490 = vmatprep.subr.mxu0 %v222
        %491 = vmatpush1.msra.mxu0 %v221
        %492 = vmatprep.subr.mxu0 %v238
        %493 = vmatpush1.msra.mxu0 %v237
        %494 = vmatprep.subr.mxu0 %v254
        %495 = vmatpush1.msra.mxu0 %v253
        %496 = vmatprep.subr.mxu0 %v270
        %497 = vmatpush1.msra.mxu0 %v269
        %498 = vmatprep.subr.mxu0 %v286
        %499 = vmatpush1.msra.mxu0 %v285
        %500 = vmatprep.subr.mxu0 %v302
        %501 = vmatpush1.msra.mxu0 %v301
        %502 = vmatprep.subr.mxu0 %v318
        %503 = vmatpush1.msra.mxu0 %v317
        %504 = vmatprep.subr.mxu0 %v334
        %505 = vmatpush1.msra.mxu0 %v333
        %506 = vmatprep.subr.mxu0 %v350
        %507 = vmatpush1.msra.mxu0 %v349
        %508 = vmatprep.subr.mxu0 %v366
        %509 = vmatpush1.msra.mxu0 %v365
        %510 = vmatprep.subr.mxu0 %v382
        %511 = vmatpush1.msra.mxu0 %v381
        %512 = vmatprep.subr.mxu0 %v398
        %513 = vmatpush1.msra.mxu0 %v397
        %514 = vmatprep.subr.mxu0 %v444
        %515 = vmatpush1.msra.mxu0 %v441
        %516 = vmatprep.subr.mxu0 0.0
        %517 = vmatpush1.msra.mxu0 0.0
        %518 = vmatprep.subr.mxu0 0.0
        %519 = vmatpush1.msra.mxu0 0.0
        %520 = vmatprep.subr.mxu0 0.0
        %521 = vmatpush1.msra.mxu0 0.0
        %522 = vmatprep.subr.mxu0 0.0
        %523 = vmatpush1.msra.mxu0 0.0
        %524 = vmatprep.subr.mxu0 0.0
        %525 = vmatpush1.msra.mxu0 0.0
        %526 = vmatprep.subr.mxu0 0.0
        %527 = vmatpush1.msra.mxu0 0.0
        %528 = vmatprep.subr.mxu0 0.0
        %529 = vmatpush1.msra.mxu0 0.0
        %530 = vmatprep.subr.mxu0 0.0
        %531 = vmatpush1.msra.mxu0 0.0
        %532 = vmatprep.subr.mxu0 0.0
        %533 = vmatpush1.msra.mxu0 0.0
        %534 = vmatprep.subr.mxu0 0.0
        %535 = vmatpush1.msra.mxu0 0.0
        %536 = vmatprep.subr.mxu0 0.0
        %537 = vmatpush1.msra.mxu0 0.0
        %538 = vmatprep.subr.mxu0 0.0
        %539 = vmatpush1.msra.mxu0 0.0
        %540 = vmatprep.subr.mxu0 0.0
        %541 = vmatpush1.msra.mxu0 0.0
        %542 = vmatprep.subr.mxu0 0.0
        %543 = vmatpush1.msra.mxu0 0.0
        %544 = vmatprep.subr.mxu0 0.0
        %545 = vmatpush1.msra.mxu0 0.0
        %546 = vmatprep.subr.mxu0 0.0
        %547 = vmatpush1.msra.mxu0 0.0
        %548 = vmatprep.subr.mxu0 0.0
        %549 = vmatpush1.msra.mxu0 0.0
        %550 = vmatprep.subr.mxu0 0.0
        %551 = vmatpush1.msra.mxu0 0.0
        %552 = vmatprep.mubr.f32.mxu0 0.0
        %553 = vmatmul.mubr.f32.gmra.mrb[0].mxu0 %v437
        %v554 = vpop.f32.mrb[0].mxu0
        %v555 = vadd.f32 %v433, %v554
        %v556 = vpop.f32.mrb[0].mxu0
        %v557 = vadd.f32 %v433, %v556
        %558 = vdwg.mxu0
        %559 = vmatprep.subr.mxu0 %v208
        %560 = vmatpush1.msra.mxu0 %v207
        %561 = vmatprep.subr.mxu0 %v224
        %562 = vmatpush1.msra.mxu0 %v223
        %563 = vmatprep.subr.mxu0 %v240
        %564 = vmatpush1.msra.mxu0 %v239
        %565 = vmatprep.subr.mxu0 %v256
        %566 = vmatpush1.msra.mxu0 %v255
        %567 = vmatprep.subr.mxu0 %v272
        %568 = vmatpush1.msra.mxu0 %v271
        %569 = vmatprep.subr.mxu0 %v288
        %570 = vmatpush1.msra.mxu0 %v287
        %571 = vmatprep.subr.mxu0 %v304
        %572 = vmatpush1.msra.mxu0 %v303
        %573 = vmatprep.subr.mxu0 %v320
        %574 = vmatpush1.msra.mxu0 %v319
        %575 = vmatprep.subr.mxu0 %v336
        %576 = vmatpush1.msra.mxu0 %v335
        %577 = vmatprep.subr.mxu0 %v352
        %578 = vmatpush1.msra.mxu0 %v351
        %579 = vmatprep.subr.mxu0 %v368
        %580 = vmatpush1.msra.mxu0 %v367
        %581 = vmatprep.subr.mxu0 %v384
        %582 = vmatpush1.msra.mxu0 %v383
        %583 = vmatprep.subr.mxu0 %v400
        %584 = vmatpush1.msra.mxu0 %v399
        %585 = vmatprep.subr.mxu0 %v450
        %586 = vmatpush1.msra.mxu0 %v447
        %587 = vmatprep.subr.mxu0 0.0
        %588 = vmatpush1.msra.mxu0 0.0
        %589 = vmatprep.subr.mxu0 0.0
        %590 = vmatpush1.msra.mxu0 0.0
        %591 = vmatprep.subr.mxu0 0.0
        %592 = vmatpush1.msra.mxu0 0.0
        %593 = vmatprep.subr.mxu0 0.0
        %594 = vmatpush1.msra.mxu0 0.0
        %595 = vmatprep.subr.mxu0 0.0
        %596 = vmatpush1.msra.mxu0 0.0
        %597 = vmatprep.subr.mxu0 0.0
        %598 = vmatpush1.msra.mxu0 0.0
        %599 = vmatprep.subr.mxu0 0.0
        %600 = vmatpush1.msra.mxu0 0.0
        %601 = vmatprep.subr.mxu0 0.0
        %602 = vmatpush1.msra.mxu0 0.0
        %603 = vmatprep.subr.mxu0 0.0
        %604 = vmatpush1.msra.mxu0 0.0
        %605 = vmatprep.subr.mxu0 0.0
        %606 = vmatpush1.msra.mxu0 0.0
        %607 = vmatprep.subr.mxu0 0.0
        %608 = vmatpush1.msra.mxu0 0.0
        %609 = vmatprep.subr.mxu0 0.0
        %610 = vmatpush1.msra.mxu0 0.0
        %611 = vmatprep.subr.mxu0 0.0
        %612 = vmatpush1.msra.mxu0 0.0
        %613 = vmatprep.subr.mxu0 0.0
        %614 = vmatpush1.msra.mxu0 0.0
        %615 = vmatprep.subr.mxu0 0.0
        %616 = vmatpush1.msra.mxu0 0.0
        %617 = vmatprep.subr.mxu0 0.0
        %618 = vmatpush1.msra.mxu0 0.0
        %619 = vmatprep.subr.mxu0 0.0
        %620 = vmatpush1.msra.mxu0 0.0
        %621 = vmatprep.subr.mxu0 0.0
        %622 = vmatpush1.msra.mxu0 0.0
        %623 = vmatprep.mubr.f32.mxu0 0.0
        %624 = vmatmul.mubr.f32.gmra.mrb[0].mxu0 %v437
        %v625 = vpop.f32.mrb[0].mxu0
        %v626 = vadd.f32 %v433, %v625
        %v627 = vpop.f32.mrb[0].mxu0
        %v628 = vadd.f32 %v433, %v627
        %629 = vdwg.mxu0
        %630 = vmatprep.subr.mxu0 %v210
        %631 = vmatpush1.msra.mxu0 %v209
        %632 = vmatprep.subr.mxu0 %v226
        %633 = vmatpush1.msra.mxu0 %v225
        %634 = vmatprep.subr.mxu0 %v242
        %635 = vmatpush1.msra.mxu0 %v241
        %636 = vmatprep.subr.mxu0 %v258
        %637 = vmatpush1.msra.mxu0 %v257
        %638 = vmatprep.subr.mxu0 %v274
        %639 = vmatpush1.msra.mxu0 %v273
        %640 = vmatprep.subr.mxu0 %v290
        %641 = vmatpush1.msra.mxu0 %v289
        %642 = vmatprep.subr.mxu0 %v306
        %643 = vmatpush1.msra.mxu0 %v305
        %644 = vmatprep.subr.mxu0 %v322
        %645 = vmatpush1.msra.mxu0 %v321
        %646 = vmatprep.subr.mxu0 %v338
        %647 = vmatpush1.msra.mxu0 %v337
        %648 = vmatprep.subr.mxu0 %v354
        %649 = vmatpush1.msra.mxu0 %v353
        %650 = vmatprep.subr.mxu0 %v370
        %651 = vmatpush1.msra.mxu0 %v369
        %652 = vmatprep.subr.mxu0 %v386
        %653 = vmatpush1.msra.mxu0 %v385
        %654 = vmatprep.subr.mxu0 %v402
        %655 = vmatpush1.msra.mxu0 %v401
        %656 = vmatprep.subr.mxu0 %v456
        %657 = vmatpush1.msra.mxu0 %v453
        %658 = vmatprep.subr.mxu0 0.0
        %659 = vmatpush1.msra.mxu0 0.0
        %660 = vmatprep.subr.mxu0 0.0
        %661 = vmatpush1.msra.mxu0 0.0
        %662 = vmatprep.subr.mxu0 0.0
        %663 = vmatpush1.msra.mxu0 0.0
        %664 = vmatprep.subr.mxu0 0.0
        %665 = vmatpush1.msra.mxu0 0.0
        %666 = vmatprep.subr.mxu0 0.0
        %667 = vmatpush1.msra.mxu0 0.0
        %668 = vmatprep.subr.mxu0 0.0
        %669 = vmatpush1.msra.mxu0 0.0
        %670 = vmatprep.subr.mxu0 0.0
        %671 = vmatpush1.msra.mxu0 0.0
        %672 = vmatprep.subr.mxu0 0.0
        %673 = vmatpush1.msra.mxu0 0.0
        %674 = vmatprep.subr.mxu0 0.0
        %675 = vmatpush1.msra.mxu0 0.0
        %676 = vmatprep.subr.mxu0 0.0
        %677 = vmatpush1.msra.mxu0 0.0
        %678 = vmatprep.subr.mxu0 0.0
        %679 = vmatpush1.msra.mxu0 0.0
        %680 = vmatprep.subr.mxu0 0.0
        %681 = vmatpush1.msra.mxu0 0.0
        %682 = vmatprep.subr.mxu0 0.0
        %683 = vmatpush1.msra.mxu0 0.0
        %684 = vmatprep.subr.mxu0 0.0
        %685 = vmatpush1.msra.mxu0 0.0
        %686 = vmatprep.subr.mxu0 0.0
        %687 = vmatpush1.msra.mxu0 0.0
        %688 = vmatprep.subr.mxu0 0.0
        %689 = vmatpush1.msra.mxu0 0.0
        %690 = vmatprep.subr.mxu0 0.0
        %691 = vmatpush1.msra.mxu0 0.0
        %692 = vmatprep.subr.mxu0 0.0
        %693 = vmatpush1.msra.mxu0 0.0
        %694 = vmatprep.mubr.f32.mxu0 0.0
        %695 = vmatmul.mubr.f32.gmra.mrb[0].mxu0 %v437
        %v696 = vpop.f32.mrb[0].mxu0
        %v697 = vadd.f32 %v433, %v696
        %v698 = vpop.f32.mrb[0].mxu0
        %v699 = vadd.f32 %v433, %v698
        %700 = vdwg.mxu0
        %701 = vmatprep.subr.mxu0 %v212
        %702 = vmatpush1.msra.mxu0 %v211
        %703 = vmatprep.subr.mxu0 %v228
        %704 = vmatpush1.msra.mxu0 %v227
        %705 = vmatprep.subr.mxu0 %v244
        %706 = vmatpush1.msra.mxu0 %v243
        %707 = vmatprep.subr.mxu0 %v260
        %708 = vmatpush1.msra.mxu0 %v259
        %709 = vmatprep.subr.mxu0 %v276
        %710 = vmatpush1.msra.mxu0 %v275
        %711 = vmatprep.subr.mxu0 %v292
        %712 = vmatpush1.msra.mxu0 %v291
        %713 = vmatprep.subr.mxu0 %v308
        %714 = vmatpush1.msra.mxu0 %v307
        %715 = vmatprep.subr.mxu0 %v324
        %716 = vmatpush1.msra.mxu0 %v323
        %717 = vmatprep.subr.mxu0 %v340
        %718 = vmatpush1.msra.mxu0 %v339
        %719 = vmatprep.subr.mxu0 %v356
        %720 = vmatpush1.msra.mxu0 %v355
        %721 = vmatprep.subr.mxu0 %v372
        %722 = vmatpush1.msra.mxu0 %v371
        %723 = vmatprep.subr.mxu0 %v388
        %724 = vmatpush1.msra.mxu0 %v387
        %725 = vmatprep.subr.mxu0 %v404
        %726 = vmatpush1.msra.mxu0 %v403
        %727 = vmatprep.subr.mxu0 %v462
        %728 = vmatpush1.msra.mxu0 %v459
        %729 = vmatprep.subr.mxu0 0.0
        %730 = vmatpush1.msra.mxu0 0.0
        %731 = vmatprep.subr.mxu0 0.0
        %732 = vmatpush1.msra.mxu0 0.0
        %733 = vmatprep.subr.mxu0 0.0
        %734 = vmatpush1.msra.mxu0 0.0
        %735 = vmatprep.subr.mxu0 0.0
        %736 = vmatpush1.msra.mxu0 0.0
        %737 = vmatprep.subr.mxu0 0.0
        %738 = vmatpush1.msra.mxu0 0.0
        %739 = vmatprep.subr.mxu0 0.0
        %740 = vmatpush1.msra.mxu0 0.0
        %741 = vmatprep.subr.mxu0 0.0
        %742 = vmatpush1.msra.mxu0 0.0
        %743 = vmatprep.subr.mxu0 0.0
        %744 = vmatpush1.msra.mxu0 0.0
        %745 = vmatprep.subr.mxu0 0.0
        %746 = vmatpush1.msra.mxu0 0.0
        %747 = vmatprep.subr.mxu0 0.0
        %748 = vmatpush1.msra.mxu0 0.0
        %749 = vmatprep.subr.mxu0 0.0
        %750 = vmatpush1.msra.mxu0 0.0
        %751 = vmatprep.subr.mxu0 0.0
        %752 = vmatpush1.msra.mxu0 0.0
        %753 = vmatprep.subr.mxu0 0.0
        %754 = vmatpush1.msra.mxu0 0.0
        %755 = vmatprep.subr.mxu0 0.0
        %756 = vmatpush1.msra.mxu0 0.0
        %757 = vmatprep.subr.mxu0 0.0
        %758 = vmatpush1.msra.mxu0 0.0
        %759 = vmatprep.subr.mxu0 0.0
        %760 = vmatpush1.msra.mxu0 0.0
        %761 = vmatprep.subr.mxu0 0.0
        %762 = vmatpush1.msra.mxu0 0.0
        %763 = vmatprep.subr.mxu0 0.0
        %764 = vmatpush1.msra.mxu0 0.0
        %765 = vmatprep.mubr.f32.mxu0 0.0
        %766 = vmatmul.mubr.f32.gmra.mrb[0].mxu0 %v437
        %v767 = vpop.f32.mrb[0].mxu0
        %v768 = vadd.f32 %v433, %v767
        %v769 = vpop.f32.mrb[0].mxu0
        %v770 = vadd.f32 %v433, %v769
        %771 = vdwg.mxu0
        %772 = vmatprep.subr.mxu0 %v214
        %773 = vmatpush1.msra.mxu0 %v213
        %774 = vmatprep.subr.mxu0 %v230
        %775 = vmatpush1.msra.mxu0 %v229
        %776 = vmatprep.subr.mxu0 %v246
        %777 = vmatpush1.msra.mxu0 %v245
        %778 = vmatprep.subr.mxu0 %v262
        %779 = vmatpush1.msra.mxu0 %v261
        %780 = vmatprep.subr.mxu0 %v278
        %781 = vmatpush1.msra.mxu0 %v277
        %782 = vmatprep.subr.mxu0 %v294
        %783 = vmatpush1.msra.mxu0 %v293
        %784 = vmatprep.subr.mxu0 %v310
        %785 = vmatpush1.msra.mxu0 %v309
        %786 = vmatprep.subr.mxu0 %v326
        %787 = vmatpush1.msra.mxu0 %v325
        %788 = vmatprep.subr.mxu0 %v342
        %789 = vmatpush1.msra.mxu0 %v341
        %790 = vmatprep.subr.mxu0 %v358
        %791 = vmatpush1.msra.mxu0 %v357
        %792 = vmatprep.subr.mxu0 %v374
        %793 = vmatpush1.msra.mxu0 %v373
        %794 = vmatprep.subr.mxu0 %v390
        %795 = vmatpush1.msra.mxu0 %v389
        %796 = vmatprep.subr.mxu0 %v406
        %797 = vmatpush1.msra.mxu0 %v405
        %798 = vmatprep.subr.mxu0 %v468
        %799 = vmatpush1.msra.mxu0 %v465
        %800 = vmatprep.subr.mxu0 0.0
        %801 = vmatpush1.msra.mxu0 0.0
        %802 = vmatprep.subr.mxu0 0.0
        %803 = vmatpush1.msra.mxu0 0.0
        %804 = vmatprep.subr.mxu0 0.0
        %805 = vmatpush1.msra.mxu0 0.0
        %806 = vmatprep.subr.mxu0 0.0
        %807 = vmatpush1.msra.mxu0 0.0
        %808 = vmatprep.subr.mxu0 0.0
        %809 = vmatpush1.msra.mxu0 0.0
        %810 = vmatprep.subr.mxu0 0.0
        %811 = vmatpush1.msra.mxu0 0.0
        %812 = vmatprep.subr.mxu0 0.0
        %813 = vmatpush1.msra.mxu0 0.0
        %814 = vmatprep.subr.mxu0 0.0
        %815 = vmatpush1.msra.mxu0 0.0
        %816 = vmatprep.subr.mxu0 0.0
        %817 = vmatpush1.msra.mxu0 0.0
        %818 = vmatprep.subr.mxu0 0.0
        %819 = vmatpush1.msra.mxu0 0.0
        %820 = vmatprep.subr.mxu0 0.0
        %821 = vmatpush1.msra.mxu0 0.0
        %822 = vmatprep.subr.mxu0 0.0
        %823 = vmatpush1.msra.mxu0 0.0
        %824 = vmatprep.subr.mxu0 0.0
        %825 = vmatpush1.msra.mxu0 0.0
        %826 = vmatprep.subr.mxu0 0.0
        %827 = vmatpush1.msra.mxu0 0.0
        %828 = vmatprep.subr.mxu0 0.0
        %829 = vmatpush1.msra.mxu0 0.0
        %830 = vmatprep.subr.mxu0 0.0
        %831 = vmatpush1.msra.mxu0 0.0
        %832 = vmatprep.subr.mxu0 0.0
        %833 = vmatpush1.msra.mxu0 0.0
        %834 = vmatprep.subr.mxu0 0.0
        %835 = vmatpush1.msra.mxu0 0.0
        %836 = vmatprep.mubr.f32.mxu0 0.0
        %837 = vmatmul.mubr.f32.gmra.mrb[0].mxu0 %v437
        %v838 = vpop.f32.mrb[0].mxu0
        %v839 = vadd.f32 %v433, %v838
        %v840 = vpop.f32.mrb[0].mxu0
        %v841 = vadd.f32 %v433, %v840
        %842 = vdwg.mxu0
        %843 = vmatprep.subr.mxu0 %v216
        %844 = vmatpush1.msra.mxu0 %v215
        %845 = vmatprep.subr.mxu0 %v232
        %846 = vmatpush1.msra.mxu0 %v231
        %847 = vmatprep.subr.mxu0 %v248
        %848 = vmatpush1.msra.mxu0 %v247
        %849 = vmatprep.subr.mxu0 %v264
        %850 = vmatpush1.msra.mxu0 %v263
        %851 = vmatprep.subr.mxu0 %v280
        %852 = vmatpush1.msra.mxu0 %v279
        %853 = vmatprep.subr.mxu0 %v296
        %854 = vmatpush1.msra.mxu0 %v295
        %855 = vmatprep.subr.mxu0 %v312
        %856 = vmatpush1.msra.mxu0 %v311
        %857 = vmatprep.subr.mxu0 %v328
        %858 = vmatpush1.msra.mxu0 %v327
        %859 = vmatprep.subr.mxu0 %v344
        %860 = vmatpush1.msra.mxu0 %v343
        %861 = vmatprep.subr.mxu0 %v360
        %862 = vmatpush1.msra.mxu0 %v359
        %863 = vmatprep.subr.mxu0 %v376
        %864 = vmatpush1.msra.mxu0 %v375
        %865 = vmatprep.subr.mxu0 %v392
        %866 = vmatpush1.msra.mxu0 %v391
        %867 = vmatprep.subr.mxu0 %v408
        %868 = vmatpush1.msra.mxu0 %v407
        %869 = vmatprep.subr.mxu0 %v474
        %870 = vmatpush1.msra.mxu0 %v471
        %871 = vmatprep.subr.mxu0 0.0
        %872 = vmatpush1.msra.mxu0 0.0
        %873 = vmatprep.subr.mxu0 0.0
        %874 = vmatpush1.msra.mxu0 0.0
        %875 = vmatprep.subr.mxu0 0.0
        %876 = vmatpush1.msra.mxu0 0.0
        %877 = vmatprep.subr.mxu0 0.0
        %878 = vmatpush1.msra.mxu0 0.0
        %879 = vmatprep.subr.mxu0 0.0
        %880 = vmatpush1.msra.mxu0 0.0
        %881 = vmatprep.subr.mxu0 0.0
        %882 = vmatpush1.msra.mxu0 0.0
        %883 = vmatprep.subr.mxu0 0.0
        %884 = vmatpush1.msra.mxu0 0.0
        %885 = vmatprep.subr.mxu0 0.0
        %886 = vmatpush1.msra.mxu0 0.0
        %887 = vmatprep.subr.mxu0 0.0
        %888 = vmatpush1.msra.mxu0 0.0
        %889 = vmatprep.subr.mxu0 0.0
        %890 = vmatpush1.msra.mxu0 0.0
        %891 = vmatprep.subr.mxu0 0.0
        %892 = vmatpush1.msra.mxu0 0.0
        %893 = vmatprep.subr.mxu0 0.0
        %894 = vmatpush1.msra.mxu0 0.0
        %895 = vmatprep.subr.mxu0 0.0
        %896 = vmatpush1.msra.mxu0 0.0
        %897 = vmatprep.subr.mxu0 0.0
        %898 = vmatpush1.msra.mxu0 0.0
        %899 = vmatprep.subr.mxu0 0.0
        %900 = vmatpush1.msra.mxu0 0.0
        %901 = vmatprep.subr.mxu0 0.0
        %902 = vmatpush1.msra.mxu0 0.0
        %903 = vmatprep.subr.mxu0 0.0
        %904 = vmatpush1.msra.mxu0 0.0
        %905 = vmatprep.subr.mxu0 0.0
        %906 = vmatpush1.msra.mxu0 0.0
        %907 = vmatprep.mubr.f32.mxu0 0.0
        %908 = vmatmul.mubr.f32.gmra.mrb[0].mxu0 %v437
        %v909 = vpop.f32.mrb[0].mxu0
        %v910 = vadd.f32 %v433, %v909
        %v911 = vpop.f32.mrb[0].mxu0
        %v912 = vadd.f32 %v433, %v911
        %913 = vdwg.mxu0
        %914 = vmatprep.subr.mxu0 %v218
        %915 = vmatpush1.msra.mxu0 %v217
        %916 = vmatprep.subr.mxu0 %v234
        %917 = vmatpush1.msra.mxu0 %v233
        %918 = vmatprep.subr.mxu0 %v250
        %919 = vmatpush1.msra.mxu0 %v249
        %920 = vmatprep.subr.mxu0 %v266
        %921 = vmatpush1.msra.mxu0 %v265
        %922 = vmatprep.subr.mxu0 %v282
        %923 = vmatpush1.msra.mxu0 %v281
        %924 = vmatprep.subr.mxu0 %v298
        %925 = vmatpush1.msra.mxu0 %v297
        %926 = vmatprep.subr.mxu0 %v314
        %927 = vmatpush1.msra.mxu0 %v313
        %928 = vmatprep.subr.mxu0 %v330
        %929 = vmatpush1.msra.mxu0 %v329
        %930 = vmatprep.subr.mxu0 %v346
        %931 = vmatpush1.msra.mxu0 %v345
        %932 = vmatprep.subr.mxu0 %v362
        %933 = vmatpush1.msra.mxu0 %v361
        %934 = vmatprep.subr.mxu0 %v378
        %935 = vmatpush1.msra.mxu0 %v377
        %936 = vmatprep.subr.mxu0 %v394
        %937 = vmatpush1.msra.mxu0 %v393
        %938 = vmatprep.subr.mxu0 %v410
        %939 = vmatpush1.msra.mxu0 %v409
        %940 = vmatprep.subr.mxu0 %v480
        %941 = vmatpush1.msra.mxu0 %v477
        %942 = vmatprep.subr.mxu0 0.0
        %943 = vmatpush1.msra.mxu0 0.0
        %944 = vmatprep.subr.mxu0 0.0
        %945 = vmatpush1.msra.mxu0 0.0
        %946 = vmatprep.subr.mxu0 0.0
        %947 = vmatpush1.msra.mxu0 0.0
        %948 = vmatprep.subr.mxu0 0.0
        %949 = vmatpush1.msra.mxu0 0.0
        %950 = vmatprep.subr.mxu0 0.0
        %951 = vmatpush1.msra.mxu0 0.0
        %952 = vmatprep.subr.mxu0 0.0
        %953 = vmatpush1.msra.mxu0 0.0
        %954 = vmatprep.subr.mxu0 0.0
        %955 = vmatpush1.msra.mxu0 0.0
        %956 = vmatprep.subr.mxu0 0.0
        %957 = vmatpush1.msra.mxu0 0.0
        %958 = vmatprep.subr.mxu0 0.0
        %959 = vmatpush1.msra.mxu0 0.0
        %960 = vmatprep.subr.mxu0 0.0
        %961 = vmatpush1.msra.mxu0 0.0
        %962 = vmatprep.subr.mxu0 0.0
        %963 = vmatpush1.msra.mxu0 0.0
        %964 = vmatprep.subr.mxu0 0.0
        %965 = vmatpush1.msra.mxu0 0.0
        %966 = vmatprep.subr.mxu0 0.0
        %967 = vmatpush1.msra.mxu0 0.0
        %968 = vmatprep.subr.mxu0 0.0
        %969 = vmatpush1.msra.mxu0 0.0
        %970 = vmatprep.subr.mxu0 0.0
        %971 = vmatpush1.msra.mxu0 0.0
        %972 = vmatprep.subr.mxu0 0.0
        %973 = vmatpush1.msra.mxu0 0.0
        %974 = vmatprep.subr.mxu0 0.0
        %975 = vmatpush1.msra.mxu0 0.0
        %976 = vmatprep.subr.mxu0 0.0
        %977 = vmatpush1.msra.mxu0 0.0
        %978 = vmatprep.mubr.f32.mxu0 0.0
        %979 = vmatmul.mubr.f32.gmra.mrb[0].mxu0 %v437
        %v980 = vpop.f32.mrb[0].mxu0
        %v981 = vadd.f32 %v433, %v980
        %v982 = vpop.f32.mrb[0].mxu0
        %v983 = vadd.f32 %v433, %v982
        %984 = vdwg.mxu0
        %985 = vmatprep.subr.mxu0 %v220
        %986 = vmatpush1.msra.mxu0 %v219
        %987 = vmatprep.subr.mxu0 %v236
        %988 = vmatpush1.msra.mxu0 %v235
        %989 = vmatprep.subr.mxu0 %v252
        %990 = vmatpush1.msra.mxu0 %v251
        %991 = vmatprep.subr.mxu0 %v268
        %992 = vmatpush1.msra.mxu0 %v267
        %993 = vmatprep.subr.mxu0 %v284
        %994 = vmatpush1.msra.mxu0 %v283
        %995 = vmatprep.subr.mxu0 %v300
        %996 = vmatpush1.msra.mxu0 %v299
        %997 = vmatprep.subr.mxu0 %v316
        %998 = vmatpush1.msra.mxu0 %v315
        %999 = vmatprep.subr.mxu0 %v332
        %1000 = vmatpush1.msra.mxu0 %v331
        %1001 = vmatprep.subr.mxu0 %v348
        %1002 = vmatpush1.msra.mxu0 %v347
        %1003 = vmatprep.subr.mxu0 %v364
        %1004 = vmatpush1.msra.mxu0 %v363
        %1005 = vmatprep.subr.mxu0 %v380
        %1006 = vmatpush1.msra.mxu0 %v379
        %1007 = vmatprep.subr.mxu0 %v396
        %1008 = vmatpush1.msra.mxu0 %v395
        %1009 = vmatprep.subr.mxu0 %v412
        %1010 = vmatpush1.msra.mxu0 %v411
        %1011 = vmatprep.subr.mxu0 %v486
        %1012 = vmatpush1.msra.mxu0 %v483
        %1013 = vmatprep.subr.mxu0 0.0
        %1014 = vmatpush1.msra.mxu0 0.0
        %1015 = vmatprep.subr.mxu0 0.0
        %1016 = vmatpush1.msra.mxu0 0.0
        %1017 = vmatprep.subr.mxu0 0.0
        %1018 = vmatpush1.msra.mxu0 0.0
        %1019 = vmatprep.subr.mxu0 0.0
        %1020 = vmatpush1.msra.mxu0 0.0
        %1021 = vmatprep.subr.mxu0 0.0
        %1022 = vmatpush1.msra.mxu0 0.0
        %1023 = vmatprep.subr.mxu0 0.0
        %1024 = vmatpush1.msra.mxu0 0.0
        %1025 = vmatprep.subr.mxu0 0.0
        %1026 = vmatpush1.msra.mxu0 0.0
        %1027 = vmatprep.subr.mxu0 0.0
        %1028 = vmatpush1.msra.mxu0 0.0
        %1029 = vmatprep.subr.mxu0 0.0
        %1030 = vmatpush1.msra.mxu0 0.0
        %1031 = vmatprep.subr.mxu0 0.0
        %1032 = vmatpush1.msra.mxu0 0.0
        %1033 = vmatprep.subr.mxu0 0.0
        %1034 = vmatpush1.msra.mxu0 0.0
        %1035 = vmatprep.subr.mxu0 0.0
        %1036 = vmatpush1.msra.mxu0 0.0
        %1037 = vmatprep.subr.mxu0 0.0
        %1038 = vmatpush1.msra.mxu0 0.0
        %1039 = vmatprep.subr.mxu0 0.0
        %1040 = vmatpush1.msra.mxu0 0.0
        %1041 = vmatprep.subr.mxu0 0.0
        %1042 = vmatpush1.msra.mxu0 0.0
        %1043 = vmatprep.subr.mxu0 0.0
        %1044 = vmatpush1.msra.mxu0 0.0
        %1045 = vmatprep.subr.mxu0 0.0
        %1046 = vmatpush1.msra.mxu0 0.0
        %1047 = vmatprep.subr.mxu0 0.0
        %1048 = vmatpush1.msra.mxu0 0.0
        %1049 = vmatprep.mubr.f32.mxu0 0.0
        %1050 = vmatmul.mubr.f32.gmra.mrb[0].mxu0 %v437
        %v1051 = vpop.f32.mrb[0].mxu0
        %v1052 = vadd.f32 %v433, %v1051
        %v1053 = vpop.f32.mrb[0].mxu0
        %v1054 = vadd.f32 %v433, %v1053
        %1055 = vdwg.mxu0
        %vm1056 = vcmp.ge.f32.partialorder %v555, 0.0
        %vm1057 = vcmp.ge.f32.partialorder %v557, 0.0
        %vm1058 = vcmp.ge.f32.partialorder %v626, 0.0
        %vm1059 = vcmp.ge.f32.partialorder %v628, 0.0
        %vm1060 = vcmp.ge.f32.partialorder %v697, 0.0
        %vm1061 = vcmp.ge.f32.partialorder %v699, 0.0
        %vm1062 = vcmp.ge.f32.partialorder %v768, 0.0
        %vm1063 = vcmp.ge.f32.partialorder %v770, 0.0
        %vm1064 = vcmp.ge.f32.partialorder %v839, 0.0
        %vm1065 = vcmp.ge.f32.partialorder %v841, 0.0
        %vm1066 = vcmp.ge.f32.partialorder %v910, 0.0
        %vm1067 = vcmp.ge.f32.partialorder %v912, 0.0
        %vm1068 = vcmp.ge.f32.partialorder %v981, 0.0
        %vm1069 = vcmp.ge.f32.partialorder %v983, 0.0
        %vm1070 = vcmp.ge.f32.partialorder %v1052, 0.0
        %vm1071 = vcmp.ge.f32.partialorder %v1054, 0.0
        %v1072 = vmul.f32 %v555, 0.01
        %v1073 = vmul.f32 %v557, 0.01
        %v1074 = vmul.f32 %v626, 0.01
        %v1075 = vmul.f32 %v628, 0.01
        %v1076 = vmul.f32 %v697, 0.01
        %v1077 = vmul.f32 %v699, 0.01
        %v1078 = vmul.f32 %v768, 0.01
        %v1079 = vmul.f32 %v770, 0.01
        %v1080 = vmul.f32 %v839, 0.01
        %v1081 = vmul.f32 %v841, 0.01
        %v1082 = vmul.f32 %v910, 0.01
        %v1083 = vmul.f32 %v912, 0.01
        %v1084 = vmul.f32 %v981, 0.01
        %v1085 = vmul.f32 %v983, 0.01
        %v1086 = vmul.f32 %v1052, 0.01
        %v1087 = vmul.f32 %v1054, 0.01
        %v1088 = vsel %vm1056, %v555, %v1072
        %v1089 = vsel %vm1057, %v557, %v1073
        %v1090 = vsel %vm1058, %v626, %v1074
        %v1091 = vsel %vm1059, %v628, %v1075
        %v1092 = vsel %vm1060, %v697, %v1076
        %v1093 = vsel %vm1061, %v699, %v1077
        %v1094 = vsel %vm1062, %v768, %v1078
        %v1095 = vsel %vm1063, %v770, %v1079
        %v1096 = vsel %vm1064, %v839, %v1080
        %v1097 = vsel %vm1065, %v841, %v1081
        %v1098 = vsel %vm1066, %v910, %v1082
        %v1099 = vsel %vm1067, %v912, %v1083
        %v1100 = vsel %vm1068, %v981, %v1084
        %v1101 = vsel %vm1069, %v983, %v1085
        %v1102 = vsel %vm1070, %v1052, %v1086
        %v1103 = vsel %vm1071, %v1054, %v1087
        %1104 = vst [vmem:[%s201] sm:$0xff] %v1088
        %1105 = vst [vmem:[%s201 + $0x8] sm:$0xff] %v1089
        %1106 = vst [vmem:[%s201 + $0x10] sm:$0xff] %v1090
        %1107 = vst [vmem:[%s201 + $0x18] sm:$0xff] %v1091
        %1108 = vst [vmem:[%s201 + $0x20] sm:$0xff] %v1092
        %1109 = vst [vmem:[%s201 + $0x28] sm:$0xff] %v1093
        %1110 = vst [vmem:[%s201 + $0x30] sm:$0xff] %v1094
        %1111 = vst [vmem:[%s201 + $0x38] sm:$0xff] %v1095
        %1112 = vst [vmem:[%s201 + $0x40] sm:$0xff] %v1096
        %1113 = vst [vmem:[%s201 + $0x48] sm:$0xff] %v1097
        %1114 = vst [vmem:[%s201 + $0x50] sm:$0xff] %v1098
        %1115 = vst [vmem:[%s201 + $0x58] sm:$0xff] %v1099
        %1116 = vst [vmem:[%s201 + $0x60] sm:$0xff] %v1100
        %1117 = vst [vmem:[%s201 + $0x68] sm:$0xff] %v1101
        %1118 = vst [vmem:[%s201 + $0x70] sm:$0xff] %v1102
        %1119 = vst [vmem:[%s201 + $0x78] sm:$0xff] %v1103
        %s1120 = sand.u32 %s97, 1
        %s1121 = scalar_lea.sflag [#allocation4], %s1120
        %s1122 = sand.u32 %s97, 1
        %s1123 = smul.addr %s1122, 128
        %s1124 = scalar_lea.vmem [#allocation7], %s1123
        // Predicated region
        $region41: #{tpu_custom_call.1} parent=31 // pred_check
          %p1125 = pneg %p107
        $region42: #{tpu_custom_call.1} parent=31 // pred_check_branch
          %1127 = sbr.rel (%p1125) target = $region44
        $region43: #{tpu_custom_call.1} parent=31 // pred_region
          %s1128 = smul.u32 16, %s21
          %s1130 = ssub.s32 2048, 2048
          %1131 = vsyncadd %s1121, %s1130
          %s1132 = smul.addr %s1128, 128
          %s1133 = scalar_lea.hbm %s3, %s1132
          %s1135 = sshll.u32 %s1124, 4
          %s1136 = int_to_ptr.vmem [resolvable:$true] %s1135
          %1138 = dma.vmem_to_hbm [thread:$0]  %s1136, 2048, %s1133, %s1121
        $region44: #{tpu_custom_call.1} parent=31 // pred_fallthru
          _
      $region32: #{tpu_custom_call.1} parent=5 // pred_fallthru
        _
      %p1139 = scmp.le.s32.totalorder 2, %s16
      // Predicated region
      $region45: #{tpu_custom_call.1} parent=5 // pred_check
        %p1140 = pneg %p1139
      $region46: #{tpu_custom_call.1} parent=5 // pred_check_branch
        %1142 = sbr.rel (%p1140) target = $region48
      $region47: #{tpu_custom_call.1} parent=5 // pred_region
        %s1143 = ssub.s32 %s16, 2
        // Predicated region
        $region49: #{tpu_custom_call.1} parent=47 // pred_check
          %p1144 = pneg %p113
        $region50: #{tpu_custom_call.1} parent=47 // pred_check_branch
          %1146 = sbr.rel (%p1144) target = $region52
        $region51: #{tpu_custom_call.1} parent=47 // pred_region
          %s1147 = sand.u32 %s98, 1
          %s1148 = scalar_lea.sflag [#allocation4], %s1147
          %s1149 = sand.u32 %s98, 1
          %s1150 = smul.addr %s1149, 128
          %s1151 = scalar_lea.vmem [#allocation7], %s1150
          %1152 = dma.done %s1148, 2048
        $region52: #{tpu_custom_call.1} parent=47 // pred_fallthru
          _
      $region48: #{tpu_custom_call.1} parent=5 // pred_fallthru
        _
    $region6: #{tpu_custom_call.1} parent=1 // loop_footer
      %s20 = sadd.s32 1, %s16
    $region7: #{tpu_custom_call.1} parent=1 // loop_footer_branch
      %15 = sbr.rel target = $region3
    $region8: #{tpu_custom_call.1} parent=1 // loop_exit
      _
    %1153 = vsyncpa [#allocation3], 1
    %s1154 = scalar_lea.sflag [#allocation3], 1
    %1155 = vsyncpa %s1154, 1
    %1156 = vsyncpa [#allocation6], 1
    %s1157 = scalar_lea.sflag [#allocation6], 1
    %1158 = vsyncpa %s1157, 1
    %1159 = vsyncpa [#allocation4], 1
    %s1160 = scalar_lea.sflag [#allocation4], 1
    %1161 = vsyncpa %s1160, 1

</llo_original>
